<compile_context>
chip_gen: v5e
topology: v5e:2x2
jax: 0.10.0
libtpu: 0.0.40
codegen_flags: <defaults>
</compile_context>

<pallas_src>
import functools

import jax
import jax.numpy as jnp
from jax import lax
from jax.experimental import pallas as pl
from jax.experimental.pallas import tpu as pltpu


def _round_up(x, m):
    return ((x + m - 1) // m) * m


def _wbce_kernel(logit_ref, label_ref, out_ref, *, n_old_classes, ignore_index):
    # logit_ref: (1, C, T_HW) native dtype ; label_ref: (1, 1, T_HW) int32
    # out_ref:   (1, C, T_HW) float32
    x = logit_ref[0].astype(jnp.float32)      # upcast after DMA (keeps HBM read narrow)
    lab = label_ref[0]                        # (1, T_HW) int32
    C = x.shape[0]

    # class value carried by each output channel: c + n_old_classes  -- (C, 1)
    cls = n_old_classes + lax.broadcasted_iota(jnp.int32, (C, 1), 0)
    valid = jnp.logical_and(cls != 0, cls != ignore_index)            # (C, 1)

    # target[c, p] = 1 iff label[p] == c + n_old_classes and that class is
    # neither background (0) nor ignore_index (matches the PyTorch loop over
    # unique label values: absent classes simply give an all-zero mask).
    hit = jnp.logical_and(lab == cls, valid)                          # (C, T_HW)

    # numerically-stable BCE-with-logits (pos_weight=None, reduction='none'):
    #   loss = max(x, 0) - x*t + log1p(exp(-|x|))
    # target is fused into the select: x*t == where(hit, x, 0)
    loss = (jnp.maximum(x, 0.0)
            - jnp.where(hit, x, 0.0)
            + jnp.log1p(jnp.exp(-jnp.abs(x))))
    out_ref[0] = loss


def wbce_loss(logit, label, *, n_old_classes=0, ignore_index=255, t_hw=2048):
    """Pallas equivalent of WBCELoss(reduction='none', pos_weight=None).forward.

    logit: (N, C, H, W) float (any float dtype; kept native until inside kernel)
    label: (N, H, W) integer class map
    returns: (N, C, H, W) float32 elementwise loss
    """
    N, C, H, W = logit.shape
    HW = H * W

    # Lane tile: multiple of 128, capped by the (128-rounded) spatial extent.
    hw128 = _round_up(HW, 128)
    tile = min(_round_up(t_hw, 128), hw128)
    HW_pad = _round_up(HW, tile)

    logit_r = logit.reshape(N, C, HW)                     # keep native dtype
    label_r = label.reshape(N, 1, HW).astype(jnp.int32)
    if HW_pad != HW:
        pad = HW_pad - HW
        logit_r = jnp.pad(logit_r, ((0, 0), (0, 0), (0, pad)))
        label_r = jnp.pad(label_r, ((0, 0), (0, 0), (0, pad)))

    kernel = functools.partial(
        _wbce_kernel, n_old_classes=n_old_classes, ignore_index=ignore_index)

    grid = (N, HW_pad // tile)

    cost = pl.CostEstimate(
        flops=6 * N * C * HW_pad,
        transcendentals=2 * N * C * HW_pad,
        bytes_accessed=(logit_r.size * logit_r.dtype.itemsize
                        + label_r.size * 4
                        + N * C * HW_pad * 4),
    )

    out = pl.pallas_call(
        kernel,
        out_shape=jax.ShapeDtypeStruct((N, C, HW_pad), jnp.float32),
        grid_spec=pltpu.PrefetchScalarGridSpec(
            num_scalar_prefetch=0,
            grid=grid,
            in_specs=[
                pl.BlockSpec((1, C, tile), lambda n, j: (n, 0, j)),
                pl.BlockSpec((1, 1, tile), lambda n, j: (n, 0, j)),
            ],
            out_specs=pl.BlockSpec((1, C, tile), lambda n, j: (n, 0, j)),
        ),
        compiler_params=pltpu.CompilerParams(
            dimension_semantics=("parallel", "parallel")),
        cost_estimate=cost,
    )(logit_r, label_r)

    return out[:, :, :HW].reshape(N, C, H, W)


def _reference(logit, label, *, n_old_classes, ignore_index):
    # pure-JAX reference mirroring the PyTorch semantics
    N, C, H, W = logit.shape
    cls = n_old_classes + jnp.arange(C, dtype=jnp.int32)                 # (C,)
    valid = (cls != 0) & (cls != ignore_index)
    tgt = (label[:, None, :, :] == cls[None, :, None, None]) & valid[None, :, None, None]
    t = tgt.astype(jnp.float32)
    x = logit.astype(jnp.float32)
    return jnp.maximum(x, 0.0) - x * t + jnp.log1p(jnp.exp(-jnp.abs(x)))


if __name__ == "__main__":
    key = jax.random.PRNGKey(0)
    k1, k2 = jax.random.split(key)

    N, C, H, W = 2, 4, 16, 16
    n_old_classes = 5
    ignore_index = 255

    logit = jax.random.normal(k1, (N, C, H, W), dtype=jnp.float32)
    # label values: background 0, ignore 255, and new classes 5..8 (-> channels 0..3)
    label_pool = jnp.array([0, 255, 5, 6, 7, 8], dtype=jnp.int32)
    idx = jax.random.randint(k2, (N, H, W), 0, label_pool.shape[0])
    label = label_pool[idx]

    loss = wbce_loss(logit, label,
                     n_old_classes=n_old_classes, ignore_index=ignore_index)
    loss = jax.block_until_ready(loss)

    ref = _reference(logit, label,
                     n_old_classes=n_old_classes, ignore_index=ignore_index)
    assert loss.shape == (N, C, H, W)
    assert jnp.allclose(loss, ref, atol=1e-5, rtol=1e-5)

    print("KERNEL_OK")
</pallas_src>

<mosaic_0001>
module attributes {stable_mosaic.version = 11 : i64} {
  func.func @_wbce_kernel(%arg0: i32, %arg1: i32, %arg2: memref<1x4x256xf32, #tpu.memory_space<vmem>>, %arg3: memref<1x1x256xi32, #tpu.memory_space<vmem>>, %arg4: memref<1x4x256xf32, #tpu.memory_space<vmem>>) attributes {dimension_semantics = [#tpu.dimension_semantics<parallel>, #tpu.dimension_semantics<parallel>], iteration_bounds = array<i64: 2, 1>, scalar_prefetch = 0 : i64, scratch_operands = 0 : i64, tpu.core_type = #tpu.core_type<tc>, window_params = [{transform_indices = @transform_0, window_bounds = array<i64: 1, 4, 256>}, {transform_indices = @transform_1, window_bounds = array<i64: 1, 1, 256>}, {transform_indices = @transform_2, window_bounds = array<i64: 1, 4, 256>}]} {
    %c0 = arith.constant 0 : index
    %c0_0 = arith.constant 0 : index
    %c0_1 = arith.constant 0 : index
    %0 = vector.load %arg2[%c0, %c0_0, %c0_1] : memref<1x4x256xf32, #tpu.memory_space<vmem>>, vector<1x4x256xf32>
    %1 = vector.shape_cast %0 : vector<1x4x256xf32> to vector<4x256xf32>
    %c0_2 = arith.constant 0 : index
    %c0_3 = arith.constant 0 : index
    %c0_4 = arith.constant 0 : index
    %2 = vector.load %arg3[%c0_2, %c0_3, %c0_4] : memref<1x1x256xi32, #tpu.memory_space<vmem>>, vector<1x1x256xi32>
    %3 = vector.shape_cast %2 : vector<1x1x256xi32> to vector<1x256xi32>
    %4 = tpu.iota {dimensions = array<i32: 0>} : vector<4x1xi32>
    %c5_i32 = arith.constant 5 : i32
    %5 = vector.broadcast %c5_i32 : i32 to vector<4x1xi32>
    %6 = arith.addi %5, %4 : vector<4x1xi32>
    %c0_i32 = arith.constant 0 : i32
    %7 = vector.broadcast %c0_i32 : i32 to vector<4x1xi32>
    %8 = arith.cmpi ne, %6, %7 : vector<4x1xi32>
    %c255_i32 = arith.constant 255 : i32
    %9 = vector.broadcast %c255_i32 : i32 to vector<4x1xi32>
    %10 = arith.cmpi ne, %6, %9 : vector<4x1xi32>
    %11 = arith.andi %8, %10 : vector<4x1xi1>
    %12 = vector.broadcast %3 : vector<1x256xi32> to vector<4x256xi32>
    %13 = vector.broadcast %6 : vector<4x1xi32> to vector<4x256xi32>
    %14 = arith.cmpi eq, %12, %13 : vector<4x256xi32>
    %15 = vector.broadcast %11 : vector<4x1xi1> to vector<4x256xi1>
    %16 = arith.andi %14, %15 : vector<4x256xi1>
    %cst = arith.constant 0.000000e+00 : f32
    %17 = vector.broadcast %cst : f32 to vector<4x256xf32>
    %18 = arith.maximumf %1, %17 : vector<4x256xf32>
    %cst_5 = arith.constant 0.000000e+00 : f32
    %19 = vector.broadcast %cst_5 : f32 to vector<4x256xf32>
    %20 = arith.select %16, %1, %19 : vector<4x256xi1>, vector<4x256xf32>
    %21 = arith.subf %18, %20 : vector<4x256xf32>
    %22 = math.absf %1 : vector<4x256xf32>
    %cst_6 = arith.constant 0.000000e+00 : f32
    %23 = vector.broadcast %cst_6 : f32 to vector<4x256xf32>
    %24 = arith.subf %23, %22 : vector<4x256xf32>
    %25 = math.exp %24 : vector<4x256xf32>
    %26 = math.log1p %25 : vector<4x256xf32>
    %27 = arith.addf %21, %26 : vector<4x256xf32>
    %c0_7 = arith.constant 0 : index
    %c0_8 = arith.constant 0 : index
    %c0_9 = arith.constant 0 : index
    %28 = vector.load %arg4[%c0_7, %c0_8, %c0_9] : memref<1x4x256xf32, #tpu.memory_space<vmem>>, vector<1x4x256xf32>
    %29 = vector.shape_cast %28 : vector<1x4x256xf32> to vector<4x256xf32>
    %30 = vector.shape_cast %27 : vector<4x256xf32> to vector<1x4x256xf32>
    tpu.vector_store %arg4[%c0_7, %c0_8, %c0_9], %30 {strides = array<i32>} : memref<1x4x256xf32, #tpu.memory_space<vmem>>, vector<1x4x256xf32>,
    return
  }
  func.func @transform_0(%arg0: i32, %arg1: i32) -> (i32, i32, i32) {
    %c0_i32 = arith.constant 0 : i32
    %c0_i32_0 = arith.constant 0 : i32
    return %arg0, %c0_i32, %arg1 : i32, i32, i32
  }
  func.func @transform_1(%arg0: i32, %arg1: i32) -> (i32, i32, i32) {
    %c0_i32 = arith.constant 0 : i32
    %c0_i32_0 = arith.constant 0 : i32
    return %arg0, %c0_i32, %arg1 : i32, i32, i32
  }
  func.func @transform_2(%arg0: i32, %arg1: i32) -> (i32, i32, i32) {
    %c0_i32 = arith.constant 0 : i32
    %c0_i32_0 = arith.constant 0 : i32
    return %arg0, %c0_i32, %arg1 : i32, i32, i32
  }
}

</mosaic_0001>

<llo_original>
// kernel: tpu_custom_call.1
$region0: #{tpu_custom_call.1}
  #allocation0 [shape = 'u32[]', space=smem, size = 0x4, offset = 0x4, fixed_abs, tag = 'smem constant byte address 0x4 - core index']
  #allocation1 [shape = 'u32[72,128]{1,0:T(1,128)}', space=vmem, size = 0x9000, scoped, tag = 'internal scratch']
  %s0 = inlined_call_operand.hbm [shape: f32[2,4,256], index: 0, kind: input, shape index: {}]
  %s1 = inlined_call_operand.hbm [shape: s32[2,1,256], index: 1, kind: input, shape index: {}]
  %s2 = inlined_call_operand.hbm [shape: f32[2,4,256], index: 2, kind: output, shape index: {}]
  %s3 = sld [smem:[#allocation0]]
  $region49: #{tpu_custom_call.1} parent=0
    _
  %s5 = ssub.s32 1, %s3
  %s6 = scalar_select 0, %s5, %s3
  $region1: #{tpu_custom_call.1} parent=0
    #allocation2 [shape = 'u8[8192]{0}', space=vmem, size = 0x2000, scoped, tag = 'input window, operand 0']
    #allocation3 [shape = 's32[2]{0}', space=sflag, size = 0x8, scoped, tag = 'scoped memory for tpu_custom_call.1']
    #allocation4 [shape = 's32[2]{0}', space=sflag, size = 0x8, scoped, tag = 'scoped memory for tpu_custom_call.1']
    #allocation5 [shape = 'u8[2048]{0}', space=vmem, size = 0x800, scoped, tag = 'input window, operand 1']
    #allocation6 [shape = 's32[2]{0}', space=sflag, size = 0x8, scoped, tag = 'scoped memory for tpu_custom_call.1']
    #allocation7 [shape = 'u8[8192]{0}', space=vmem, size = 0x2000, scoped, tag = 'output window, operand 0']
    %7 = vsyncpa [#allocation3], 0
    %s8 = scalar_lea.sflag [#allocation3], 1
    %9 = vsyncpa %s8, 0
    %10 = vsyncpa [#allocation6], 0
    %s11 = scalar_lea.sflag [#allocation6], 1
    %12 = vsyncpa %s11, 0
    %13 = vsyncpa [#allocation4], 0
    %s14 = scalar_lea.sflag [#allocation4], 1
    %15 = vsyncpa %s14, 0
    loop: start=0, step=1, limit=4
    $region2: #{tpu_custom_call.1} parent=1 // loop_pre_header
      _
    $region3: #{tpu_custom_call.1} parent=1 // loop_header
      %s17 = sphi 0, %s21
      %p18 = scmp.ge.s32.totalorder %s17, 4
      %s24 = sphi 0, %s36
      %s25 = sphi 0, %s32
      %s26 = sphi 0, %s24
      %s27 = sphi 0, %s25
      %s28 = sphi 0, %s26
      %s29 = sphi 0, %s27
      %s41 = sphi 0, %s43
      %s44 = sphi 0, %s41
      %s45 = sphi 0, %s44
      %s61 = sphi 0, %s45
      %s69 = sphi 0, %s71
      %s72 = sphi 0, %s69
      %s73 = sphi 0, %s72
      %s89 = sphi 0, %s73
      %s97 = sphi 0, %s99
      %s100 = sphi 0, %s97
      %s101 = sphi 0, %s100
      %s117 = sphi 0, %s101
    $region4: #{tpu_custom_call.1} parent=1 // loop_header_branch
      %20 = sbr.rel (%p18) target = $region8
    $region5: #{tpu_custom_call.1} parent=1 // loop_body
      %s22 = ssub.s32 %s17, 1
      %s23 = ssub.s32 %s17, 2
      %s30 = sadd.s32 1, %s25
      %p31 = scmp.ge.s32.totalorder %s30, 1
      %s32 = scalar_select %p31, 0, %s30
      %s33 = sadd.s32 1, %s24
      %s34 = scalar_select %p31, %s33, %s24
      %p35 = scmp.ge.s32.totalorder %s34, 2
      %s36 = scalar_select %p35, 0, %s34
      %s37 = ssub.s32 %s24, %s36
      %s38 = ssub.s32 %s25, %s32
      %s39 = sor.u32 %s37, %s38
      %p40 = scmp.eq.s32.totalorder %s39, 0
      %s42 = sadd.s32 %s41, 1
      %s43 = scalar_select %p40, %s41, %s42
      %p46 = pneg %p40
      %p47 = scmp.eq.s32.totalorder %s17, 1
      %p48 = por %p46, %p47
      %p49 = scmp.ne.s32.totalorder %s41, %s44
      %p50 = scmp.eq.s32.totalorder %s17, 0
      %p51 = por %p49, %p50
      %p52 = scmp.ne.s32.totalorder %s41, %s44
      %p53 = scmp.eq.s32.totalorder %s22, 1
      %p54 = por %p52, %p53
      %p55 = scmp.ne.s32.totalorder %s44, %s45
      %p56 = scmp.eq.s32.totalorder %s22, 0
      %p57 = por %p55, %p56
      %p58 = scmp.ne.s32.totalorder %s44, %s45
      %p59 = scmp.eq.s32.totalorder %s23, 1
      %p60 = por %p58, %p59
      %p62 = scmp.ne.s32.totalorder %s45, %s61
      %p63 = scmp.eq.s32.totalorder %s23, 0
      %p64 = por %p62, %p63
      %s65 = ssub.s32 %s24, %s36
      %s66 = ssub.s32 %s25, %s32
      %s67 = sor.u32 %s65, %s66
      %p68 = scmp.eq.s32.totalorder %s67, 0
      %s70 = sadd.s32 %s69, 1
      %s71 = scalar_select %p68, %s69, %s70
      %p74 = pneg %p68
      %p75 = scmp.eq.s32.totalorder %s17, 1
      %p76 = por %p74, %p75
      %p77 = scmp.ne.s32.totalorder %s69, %s72
      %p78 = scmp.eq.s32.totalorder %s17, 0
      %p79 = por %p77, %p78
      %p80 = scmp.ne.s32.totalorder %s69, %s72
      %p81 = scmp.eq.s32.totalorder %s22, 1
      %p82 = por %p80, %p81
      %p83 = scmp.ne.s32.totalorder %s72, %s73
      %p84 = scmp.eq.s32.totalorder %s22, 0
      %p85 = por %p83, %p84
      %p86 = scmp.ne.s32.totalorder %s72, %s73
      %p87 = scmp.eq.s32.totalorder %s23, 1
      %p88 = por %p86, %p87
      %p90 = scmp.ne.s32.totalorder %s73, %s89
      %p91 = scmp.eq.s32.totalorder %s23, 0
      %p92 = por %p90, %p91
      %s93 = ssub.s32 %s24, %s36
      %s94 = ssub.s32 %s25, %s32
      %s95 = sor.u32 %s93, %s94
      %p96 = scmp.eq.s32.totalorder %s95, 0
      %s98 = sadd.s32 %s97, 1
      %s99 = scalar_select %p96, %s97, %s98
      %p102 = pneg %p96
      %p103 = scmp.eq.s32.totalorder %s17, 1
      %p104 = por %p102, %p103
      %p105 = scmp.ne.s32.totalorder %s97, %s100
      %p106 = scmp.eq.s32.totalorder %s17, 0
      %p107 = por %p105, %p106
      %p108 = scmp.ne.s32.totalorder %s97, %s100
      %p109 = scmp.eq.s32.totalorder %s22, 1
      %p110 = por %p108, %p109
      %p111 = scmp.ne.s32.totalorder %s100, %s101
      %p112 = scmp.eq.s32.totalorder %s22, 0
      %p113 = por %p111, %p112
      %p114 = scmp.ne.s32.totalorder %s100, %s101
      %p115 = scmp.eq.s32.totalorder %s23, 1
      %p116 = por %p114, %p115
      %p118 = scmp.ne.s32.totalorder %s101, %s117
      %p119 = scmp.eq.s32.totalorder %s23, 0
      %p120 = por %p118, %p119
      %p121 = scmp.le.s32.totalorder 1, %s17
      %p122 = scmp.lt.s32.totalorder %s17, 3
      %p123 = pnand %p121, %p122
      %p124 = pneg %p123
      // Predicated region
      $region9: #{tpu_custom_call.1} parent=5 // pred_check
        _
      $region10: #{tpu_custom_call.1} parent=5 // pred_check_branch
        %126 = sbr.rel (%p123) target = $region12
      $region11: #{tpu_custom_call.1} parent=5 // pred_region
        %s127 = ssub.s32 %s17, 1
      $region12: #{tpu_custom_call.1} parent=5 // pred_fallthru
        _
      %p128 = scmp.lt.s32.totalorder %s17, 2
      // Predicated region
      $region13: #{tpu_custom_call.1} parent=5 // pred_check
        %p129 = pneg %p128
      $region14: #{tpu_custom_call.1} parent=5 // pred_check_branch
        %131 = sbr.rel (%p129) target = $region16
      $region15: #{tpu_custom_call.1} parent=5 // pred_region
        // Predicated region
        $region17: #{tpu_custom_call.1} parent=15 // pred_check
          %p132 = pneg %p51
        $region18: #{tpu_custom_call.1} parent=15 // pred_check_branch
          %134 = sbr.rel (%p132) target = $region20
        $region19: #{tpu_custom_call.1} parent=15 // pred_region
          %s135 = sand.u32 %s41, 1
          %s136 = scalar_lea.sflag [#allocation3], %s135
          %s137 = sand.u32 %s41, 1
          %s138 = smul.addr %s137, 8
          %s139 = scalar_lea.vmem [#allocation2], %s138
          %s140 = smul.u32 2, %s25
          %142 = vsyncadd %s136, 0
          %s143 = smul.addr %s24, 2
          %s144 = sadd.s32 %s140, %s143
          %s145 = smul.addr %s144, 4
          %s146 = scalar_lea.hbm %s0, %s145
          %s148 = sshll.u32 %s146, 4
          %s149 = int_to_ptr.hbm [resolvable:$true] %s148
          %s150 = sshll.u32 %s139, 4
          %s151 = int_to_ptr.vmem [resolvable:$true] %s150
          %153 = dma.hbm_to_vmem [thread:$0]  %s149, 128, %s151, %s136
        $region20: #{tpu_custom_call.1} parent=15 // pred_fallthru
          _
        // Predicated region
        $region21: #{tpu_custom_call.1} parent=15 // pred_check
          %p154 = pneg %p79
        $region22: #{tpu_custom_call.1} parent=15 // pred_check_branch
          %156 = sbr.rel (%p154) target = $region24
        $region23: #{tpu_custom_call.1} parent=15 // pred_region
          %s157 = sand.u32 %s69, 1
          %s158 = scalar_lea.sflag [#allocation6], %s157
          %s159 = sand.u32 %s69, 1
          %s160 = smul.addr %s159, 2
          %s161 = scalar_lea.vmem [#allocation5], %s160
          %s162 = smul.u32 2, %s25
          %164 = vsyncadd %s158, 0
          %s165 = smul.addr %s24, 2
          %s166 = sadd.s32 %s162, %s165
          %s167 = scalar_lea.hbm %s1, %s166
          %s169 = sshll.u32 %s167, 4
          %s170 = int_to_ptr.hbm [resolvable:$true] %s169
          %s171 = sshll.u32 %s161, 4
          %s172 = int_to_ptr.vmem [resolvable:$true] %s171
          %174 = dma.hbm_to_vmem [thread:$0]  %s170, 32, %s172, %s158
        $region24: #{tpu_custom_call.1} parent=15 // pred_fallthru
          _
      $region16: #{tpu_custom_call.1} parent=5 // pred_fallthru
        _
      %p175 = scmp.le.s32.totalorder 1, %s17
      %p176 = scmp.lt.s32.totalorder %s17, 3
      %p177 = pnand %p175, %p176
      %p178 = pneg %p177
      // Predicated region
      $region25: #{tpu_custom_call.1} parent=5 // pred_check
        _
      $region26: #{tpu_custom_call.1} parent=5 // pred_check_branch
        %180 = sbr.rel (%p177) target = $region28
      $region27: #{tpu_custom_call.1} parent=5 // pred_region
        %s181 = ssub.s32 %s17, 1
        %s182 = sand.u32 %s44, 1
        %s183 = scalar_lea.sflag [#allocation3], %s182
        %s184 = sand.u32 %s44, 1
        %s185 = smul.addr %s184, 8
        %s186 = scalar_lea.vmem [#allocation2], %s185
        // Predicated region
        $region29: #{tpu_custom_call.1} parent=27 // pred_check
          %p187 = pneg %p57
        $region30: #{tpu_custom_call.1} parent=27 // pred_check_branch
          %189 = sbr.rel (%p187) target = $region32
        $region31: #{tpu_custom_call.1} parent=27 // pred_region
          %191 = dma.done %s183, 128
        $region32: #{tpu_custom_call.1} parent=27 // pred_fallthru
          _
        %s192 = sand.u32 %s72, 1
        %s193 = scalar_lea.sflag [#allocation6], %s192
        %s194 = sand.u32 %s72, 1
        %s195 = smul.addr %s194, 2
        %s196 = scalar_lea.vmem [#allocation5], %s195
        // Predicated region
        $region33: #{tpu_custom_call.1} parent=27 // pred_check
          %p197 = pneg %p85
        $region34: #{tpu_custom_call.1} parent=27 // pred_check_branch
          %199 = sbr.rel (%p197) target = $region36
        $region35: #{tpu_custom_call.1} parent=27 // pred_region
          %201 = dma.done %s193, 32
        $region36: #{tpu_custom_call.1} parent=27 // pred_fallthru
          _
        %s202 = sand.u32 %s44, 1
        %s203 = scalar_lea.sflag [#allocation3], %s202
        %s204 = sand.u32 %s44, 1
        %s205 = smul.addr %s204, 8
        %s206 = scalar_lea.vmem [#allocation2], %s205
        %p207 = pneg %p57
        %p208 = pneg %p54
        %s209 = sand.u32 %s72, 1
        %s210 = scalar_lea.sflag [#allocation6], %s209
        %s211 = sand.u32 %s72, 1
        %s212 = smul.addr %s211, 2
        %s213 = scalar_lea.vmem [#allocation5], %s212
        %p214 = pneg %p85
        %p215 = pneg %p82
        %p216 = pneg %p113
        %p217 = pneg %p110
        %s218 = sand.u32 %s100, 1
        %s219 = scalar_lea.sflag [#allocation4], %s218
        %s220 = sand.u32 %s100, 1
        %s221 = smul.addr %s220, 8
        %s222 = scalar_lea.vmem [#allocation7], %s221
        %s223 = smul.u32 2, %s27
        %s224 = smul.u32 2, %s27
        %s225 = smul.u32 2, %s27
        %v226 = vld [vmem:[%s186] sm:$0xff]
        %v227 = vld [vmem:[%s196] sm:$0x3]
        %v228 = vlaneseq
        %v229 = vshrl.u32 %v228, 7
        %v230 = vadd.s32 %v229, 5
        %vm231 = vcmp.ne.s32.totalorder %v230, 0
        %vm232 = vcmp.ne.s32.totalorder %v230, 255
        %vm233 = vmand %vm231, %vm232
        %v234 = vperm.slane %v227, 0
        %v235 = vperm.slane %v227, 1
        %vm236 = vcmp.eq.s32.totalorder %v234, %v230
        %vm237 = vcmp.eq.s32.totalorder %v235, %v230
        %v238 = vsel %vm233, 1, 0
        %vm239 = vcmp.eq.s32.totalorder %v238, 1
        %vm240 = vmand %vm236, %vm239
        %vm241 = vmand %vm237, %vm239
        %v242 = vmax.f32 %v226, 0.0
        %244 = vst [vmem:[#allocation1] ss:$2 sm:$0xff] %v226
        %v245 = vld.sshfl [vmem:[#allocation1] sm:$0xff pattern:$0x75316420]
        %v246 = vld.sshfl [vmem:[#allocation1 + $0x8] sm:$0xff pattern:$0x75316420]
        %v249 = vsel %vm240, %v245, 0.0
        %v250 = vsel %vm241, %v246, 0.0
        %v253 = vrot.slane %v250, 4
        %vm254 = vcmask 1043456
        %v255 = vsel %vm254, %v249, %v253
        %v257 = vsub.f32 %v242, %v255
        %v258 = vand.u32 2147483647, %v226
        %v259 = vsub.f32 0.0, %v258
        %v260 = vmul.f32 %v259, 1.442695
        %v261 = vpow.pop %v260
        %v262 = vadd.f32 %v261, 1.0
        %v263 = vlog2.pop %v262
        %v264 = vmul.f32 %v263, 0.6931472
        %v265 = vmul.f32 -0.5, %v261
        %v266 = vadd.f32 %v265, 1.0
        %v267 = vmul.f32 %v266, %v261
        %v268 = vand.u32 2147483647, %v261
        %vm269 = vcmp.lt.f32.partialorder %v268, 0.0004427343
        %v270 = vsel %vm269, %v267, %v264
        %v271 = vadd.f32 %v257, %v270
        %272 = vst [vmem:[%s222] sm:$0xff] %v271
        %s273 = sand.u32 %s100, 1
        %s274 = scalar_lea.sflag [#allocation4], %s273
        %s275 = sand.u32 %s100, 1
        %s276 = smul.addr %s275, 8
        %s277 = scalar_lea.vmem [#allocation7], %s276
        // Predicated region
        $region37: #{tpu_custom_call.1} parent=27 // pred_check
          %p278 = pneg %p110
        $region38: #{tpu_custom_call.1} parent=27 // pred_check_branch
          %280 = sbr.rel (%p278) target = $region40
        $region39: #{tpu_custom_call.1} parent=27 // pred_region
          %s281 = smul.u32 2, %s27
          %283 = vsyncadd %s274, 0
          %s284 = smul.addr %s26, 2
          %s285 = sadd.s32 %s281, %s284
          %s286 = smul.addr %s285, 4
          %s287 = scalar_lea.hbm %s2, %s286
          %s289 = sshll.u32 %s277, 4
          %s290 = int_to_ptr.vmem [resolvable:$true] %s289
          %s291 = sshll.u32 %s287, 4
          %s292 = int_to_ptr.hbm [resolvable:$true] %s291
          %294 = dma.vmem_to_hbm [thread:$0]  %s290, 128, %s292, %s274
        $region40: #{tpu_custom_call.1} parent=27 // pred_fallthru
          _
      $region28: #{tpu_custom_call.1} parent=5 // pred_fallthru
        _
      %p295 = scmp.le.s32.totalorder 2, %s17
      // Predicated region
      $region41: #{tpu_custom_call.1} parent=5 // pred_check
        %p296 = pneg %p295
      $region42: #{tpu_custom_call.1} parent=5 // pred_check_branch
        %298 = sbr.rel (%p296) target = $region44
      $region43: #{tpu_custom_call.1} parent=5 // pred_region
        %s299 = ssub.s32 %s17, 2
        // Predicated region
        $region45: #{tpu_custom_call.1} parent=43 // pred_check
          %p300 = pneg %p116
        $region46: #{tpu_custom_call.1} parent=43 // pred_check_branch
          %302 = sbr.rel (%p300) target = $region48
        $region47: #{tpu_custom_call.1} parent=43 // pred_region
          %s303 = sand.u32 %s101, 1
          %s304 = scalar_lea.sflag [#allocation4], %s303
          %s305 = sand.u32 %s101, 1
          %s306 = smul.addr %s305, 8
          %s307 = scalar_lea.vmem [#allocation7], %s306
          %309 = dma.done %s304, 128
        $region48: #{tpu_custom_call.1} parent=43 // pred_fallthru
          _
      $region44: #{tpu_custom_call.1} parent=5 // pred_fallthru
        _
    $region6: #{tpu_custom_call.1} parent=1 // loop_footer
      %s21 = sadd.s32 1, %s17
    $region7: #{tpu_custom_call.1} parent=1 // loop_footer_branch
      %16 = sbr.rel target = $region3
    $region8: #{tpu_custom_call.1} parent=1 // loop_exit
      _
    %310 = vsyncpa [#allocation3], 1
    %s311 = scalar_lea.sflag [#allocation3], 1
    %312 = vsyncpa %s311, 1
    %313 = vsyncpa [#allocation6], 1
    %s314 = scalar_lea.sflag [#allocation6], 1
    %315 = vsyncpa %s314, 1
    %316 = vsyncpa [#allocation4], 1
    %s317 = scalar_lea.sflag [#allocation4], 1
    %318 = vsyncpa %s317, 1

</llo_original>
